<compile_context>
chip_gen: v6e
topology: v6e:2x2x1
jax: 0.10.0
libtpu: 0.0.40
codegen_flags: <defaults>
</compile_context>

<pallas_src>
import functools

import jax
import jax.numpy as jnp
from jax.experimental import pallas as pl
from jax.experimental.pallas import tpu as pltpu


# ---------------------------------------------------------------------------
# Static layout helpers
# ---------------------------------------------------------------------------

def _round_up(v, m):
    return -(-v // m) * m


def _slab_layout(k, h2, o):
    """Row/lane layout of the single-example packed weight slab.

    Sections start at sublane (8)-aligned rows so in-kernel slices stay tile
    friendly:
      row 0        : conv weight repeated D times      (K lanes)
      row 1        : conv bias   repeated D times      (K lanes)
      rows r1..    : fc1 weight^T  (K, H2)             (H2 lanes)
      row  r1+K    : fc1 bias      (1, H2)
      rows r2..    : fc2 weight^T  (H2, O)             (O lanes)
      row  r2+H2   : fc2 bias      (1, O)
    """
    lanes = max(k, h2, o)
    r1 = 8
    r2 = _round_up(r1 + k + 1, 8)
    rows = r2 + h2 + 1
    return lanes, r1, r2, rows


def _pick_tile_b(b):
    """Batch tile: big enough to amortize per-grid-step overhead (~0.35us) and
    approach the HBM roofline, but keep >= 2 grid steps whenever B > 128 so the
    'parallel' batch axis can be sharded across v7x's two TensorCores."""
    half = -(-b // 2)
    tile = _round_up(half, 128)
    return max(128, min(2048, tile))


# ---------------------------------------------------------------------------
# Kernels
# ---------------------------------------------------------------------------

def _cntk1d_single_kernel(x_ref, slab_ref, out_ref, *, h1, k, h2, o, r1, r2):
    """Single example.  Ref shapes:
         x_ref    (1, D)        raw input row
         slab_ref (rows, lanes) packed weights, layout per _slab_layout
         out_ref  (1, O)        lane-dense output row
    """
    # Replicate x H1 times along lanes -> torch's view(-1) flat order k = h*D + d.
    x_rep = jnp.concatenate([x_ref[...]] * h1, axis=1)                        # (1, K)

    # conv1d(kernel_size=1) + ReLU: pure VPU work on one (1, K) row.
    a = jnp.maximum(slab_ref[0:1, :k] * x_rep + slab_ref[1:2, :k], 0.0)       # (1, K)

    # fc1 + ReLU: one (1, K) @ (K, H2) MXU matmul.
    y = jnp.dot(a, slab_ref[r1:r1 + k, :h2],
                preferred_element_type=jnp.float32)
    y = jnp.maximum(y + slab_ref[r1 + k:r1 + k + 1, :h2], 0.0)                # (1, H2)

    # fc2: (1, H2) @ (H2, O) -> lane-dense (1, O) row.
    out = jnp.dot(y, slab_ref[r2:r2 + h2, :o],
                  preferred_element_type=jnp.float32)
    out_ref[...] = out + slab_ref[r2 + h2:r2 + h2 + 1, :o]                    # (1, O)


def _cntk1d_batched_kernel(x_ref, conv_ref, fc1_ref, fc2_ref, out_ref, *, h1):
    """Batch tile (module applied independently per row).  Ref shapes:
         x_ref    (TB, D)     raw input rows (NOT pre-tiled)
         conv_ref (2, K)      row 0: conv w repeated D times, row 1: conv b repeated
         fc1_ref  (K+1, H2)   rows 0..K-1: fc1 weight^T, row K: fc1 bias
         fc2_ref  (O, H2+1)   cols 0..H2-1: fc2 weight rows, col H2: fc2 bias
         out_ref  (O, TB)     lane-dense: batch on lanes
    """
    k = conv_ref.shape[1]
    h2 = fc1_ref.shape[1]

    # Replicate the (TB, D) block H1 times along lanes -> view(-1) flat order.
    x_rep = jnp.concatenate([x_ref[...]] * h1, axis=1)                        # (TB, K)

    # conv1d(kernel_size=1) + ReLU on VPU.
    a = jnp.maximum(conv_ref[0:1, :] * x_rep + conv_ref[1:2, :], 0.0)         # (TB, K)

    # fc1 + ReLU: (TB, K) @ (K, H2) MXU matmul.
    y = jnp.dot(a, fc1_ref[:k, :], preferred_element_type=jnp.float32)
    y = jnp.maximum(y + fc1_ref[k:k + 1, :], 0.0)                             # (TB, H2)

    # fc2 with batch on lanes: (O, H2) . (TB, H2)^T -> (O, TB), unmasked stores.
    out = jax.lax.dot_general(
        fc2_ref[:, :h2], y,
        dimension_numbers=(((1,), (1,)), ((), ())),
        preferred_element_type=jnp.float32)                                   # (O, TB)
    out_ref[...] = out + fc2_ref[:, h2:h2 + 1]


# ---------------------------------------------------------------------------
# One-time parameter packing (model-load time, NOT per forward call)
# ---------------------------------------------------------------------------

def pack_cntk1d_params(conv_w, conv_b, fc1_w, fc1_b, fc2_w, fc2_b, input_dim):
    """Repack torch-layout parameters once into the kernels' operand layouts."""
    h1 = conv_w.shape[0]
    h2, k = fc1_w.shape
    o = fc2_w.shape[0]
    assert k == h1 * input_dim, "fc1 in_features must equal hidden_size1 * input_dim"
    f32 = jnp.float32

    # conv params repeated D times each so flat index k = h*D + d picks w1[h], b1[h].
    w1_rep = jnp.repeat(conv_w.reshape(h1).astype(f32), input_dim)            # (K,)
    b1_rep = jnp.repeat(conv_b.reshape(h1).astype(f32), input_dim)            # (K,)
    conv_pack = jnp.stack([w1_rep, b1_rep], axis=0)                           # (2, K)

    # fc1 weight transposed to (K, H2) so y = a_flat @ W; bias appended as last row.
    fc1_pack = jnp.concatenate(
        [fc1_w.T.astype(f32), fc1_b.reshape(1, h2).astype(f32)], axis=0)      # (K+1, H2)

    # fc2 packed row-wise for the batched lane-dense output (W2 . y^T).
    fc2_rows = jnp.concatenate(
        [fc2_w.astype(f32), fc2_b.reshape(o, 1).astype(f32)], axis=1)         # (O, H2+1)

    # Single-example path: ONE packed slab (one operand, one DMA).
    lanes, r1, r2, rows = _slab_layout(k, h2, o)
    slab = jnp.zeros((rows, lanes), f32)
    slab = slab.at[0, :k].set(w1_rep)
    slab = slab.at[1, :k].set(b1_rep)
    slab = slab.at[r1:r1 + k, :h2].set(fc1_w.T.astype(f32))
    slab = slab.at[r1 + k, :h2].set(fc1_b.astype(f32))
    slab = slab.at[r2:r2 + h2, :o].set(fc2_w.T.astype(f32))
    slab = slab.at[r2 + h2, :o].set(fc2_b.astype(f32))

    return dict(conv_pack=conv_pack, fc1_pack=fc1_pack,
                fc2_rows=fc2_rows, slab=slab)


# ---------------------------------------------------------------------------
# Forward wrappers
# ---------------------------------------------------------------------------

@jax.jit
def cntk_1d_forward(x, params):
    """x: (1, 1, input_dim) -> (output_size,), matching CNTK_1D.forward exactly."""
    assert x.shape[0] == 1 and x.shape[1] == 1, "view(-1)+fc1 implies batch=1, C=1"
    d = x.shape[2]
    k = params["conv_pack"].shape[1]
    h2 = params["fc1_pack"].shape[1]
    o = params["fc2_rows"].shape[0]
    h1 = k // d
    _, r1, r2, _ = _slab_layout(k, h2, o)

    x_row = x.reshape(1, d).astype(jnp.float32)                               # (1, D)
    kernel = functools.partial(_cntk1d_single_kernel,
                               h1=h1, k=k, h2=h2, o=o, r1=r1, r2=r2)

    out = pl.pallas_call(
        kernel,
        out_shape=jax.ShapeDtypeStruct((1, o), jnp.float32),
        # No grid: single invocation, 2 operands in VMEM, no pipeline bookkeeping.
        in_specs=[pl.BlockSpec(memory_space=pltpu.MemorySpace.VMEM)] * 2,
        out_specs=pl.BlockSpec(memory_space=pltpu.MemorySpace.VMEM),
    )(x_row, params["slab"])
    return out.reshape(o)


@jax.jit
def cntk_1d_forward_batched(xb, params):
    """Throughput path: apply the batch-1 module independently to xb: (B, 1, D) -> (B, O)."""
    b, c, d = xb.shape
    assert c == 1
    conv_pack = params["conv_pack"]
    fc1_pack = params["fc1_pack"]
    fc2_rows = params["fc2_rows"]
    k = conv_pack.shape[1]
    h1 = k // d
    h2 = fc1_pack.shape[1]
    o = fc2_rows.shape[0]

    x2d = xb.reshape(b, d).astype(jnp.float32)        # raw (B, D): no pre-tile, no pad
    tile_b = _pick_tile_b(b)
    grid = (pl.cdiv(b, tile_b),)                      # ragged last tile handled by Pallas

    kernel = functools.partial(_cntk1d_batched_kernel, h1=h1)
    out = pl.pallas_call(
        kernel,
        out_shape=jax.ShapeDtypeStruct((o, b), jnp.float32),   # lane-dense: batch on lanes
        grid=grid,
        in_specs=[
            pl.BlockSpec((tile_b, d), lambda i: (i, 0)),
            pl.BlockSpec((2, k), lambda i: (0, 0)),
            pl.BlockSpec((k + 1, h2), lambda i: (0, 0)),
            pl.BlockSpec((o, h2 + 1), lambda i: (0, 0)),
        ],
        out_specs=pl.BlockSpec((o, tile_b), lambda i: (0, i)),
        compiler_params=pltpu.CompilerParams(
            dimension_semantics=("parallel",)),  # v7x: shard batch across both TCs
    )(x2d, conv_pack, fc1_pack, fc2_rows)
    return out.T                                                 # (B, O)


# ---------------------------------------------------------------------------
# Pure-JAX reference (matches the torch forward exactly)
# ---------------------------------------------------------------------------

def _reference_single(x_vec, conv_w, conv_b, fc1_w, fc1_b, fc2_w, fc2_b):
    hi = jax.lax.Precision.HIGHEST
    a = jnp.maximum(conv_w.reshape(-1, 1) * x_vec.reshape(1, -1)
                    + conv_b.reshape(-1, 1), 0.0)                 # (H1, D)
    flat = a.reshape(-1)                                          # torch view(-1) order
    y = jnp.maximum(jnp.dot(fc1_w, flat, precision=hi) + fc1_b, 0.0)
    return jnp.dot(fc2_w, y, precision=hi) + fc2_b


if __name__ == "__main__":
    input_dim, hidden_size1, hidden_size2, output_size = 16, 8, 32, 1

    key = jax.random.PRNGKey(0)
    ks = jax.random.split(key, 8)
    x = jax.random.normal(ks[0], (1, 1, input_dim), dtype=jnp.float32)
    conv_w = jax.random.normal(ks[1], (hidden_size1, 1, 1), dtype=jnp.float32) * 0.5
    conv_b = jax.random.normal(ks[2], (hidden_size1,), dtype=jnp.float32) * 0.1
    fc1_w = jax.random.normal(ks[3], (hidden_size2, hidden_size1 * input_dim),
                              dtype=jnp.float32) * 0.1
    fc1_b = jax.random.normal(ks[4], (hidden_size2,), dtype=jnp.float32) * 0.1
    fc2_w = jax.random.normal(ks[5], (output_size, hidden_size2),
                              dtype=jnp.float32) * 0.1
    fc2_b = jax.random.normal(ks[6], (output_size,), dtype=jnp.float32) * 0.1

    # Pack weights ONCE (model-load time).
    params = pack_cntk1d_params(conv_w, conv_b, fc1_w, fc1_b, fc2_w, fc2_b, input_dim)

    # 1) Exact module semantics (batch = 1).
    out = jax.block_until_ready(cntk_1d_forward(x, params))
    ref = _reference_single(x.reshape(-1), conv_w, conv_b, fc1_w, fc1_b, fc2_w, fc2_b)
    assert out.shape == (output_size,)
    assert jnp.allclose(out, ref, rtol=1e-5, atol=1e-5), (out, ref)

    # 2) Batched throughput path: exercises the ragged last tile (200) and a
    #    >128-row batch tile with 2 'parallel' grid steps (1030).
    for batch in (200, 1030):
        xb = jax.random.normal(jax.random.fold_in(ks[7], batch),
                               (batch, 1, input_dim), dtype=jnp.float32)
        out_b = jax.block_until_ready(cntk_1d_forward_batched(xb, params))
        ref_b = jax.vmap(lambda xv: _reference_single(
            xv.reshape(-1), conv_w, conv_b, fc1_w, fc1_b, fc2_w, fc2_b))(xb)
        assert out_b.shape == (batch, output_size)
        assert jnp.allclose(out_b, ref_b, rtol=1e-4, atol=1e-4), (
            float(jnp.max(jnp.abs(out_b - ref_b))))

    print("KERNEL_OK")
</pallas_src>

<mosaic_0001>
module attributes {stable_mosaic.version = 11 : i64} {
  func.func @_cntk1d_single_kernel(%arg0: memref<1x16xf32, #tpu.memory_space<vmem>>, %arg1: memref<177x128xf32, #tpu.memory_space<vmem>>, %arg2: memref<1x1xf32, #tpu.memory_space<vmem>>) attributes {dimension_semantics = [], scalar_prefetch = 0 : i64, scratch_operands = 0 : i64, tpu.core_type = #tpu.core_type<tc>} {
    %c0 = arith.constant 0 : index
    %c0_0 = arith.constant 0 : index
    %0 = vector.load %arg0[%c0, %c0_0] : memref<1x16xf32, #tpu.memory_space<vmem>>, vector<1x16xf32>
    %1 = tpu.concatenate %0, %0, %0, %0, %0, %0, %0, %0 in 1 : vector<1x16xf32>, vector<1x16xf32>, vector<1x16xf32>, vector<1x16xf32>, vector<1x16xf32>, vector<1x16xf32>, vector<1x16xf32>, vector<1x16xf32> -> vector<1x128xf32>
    %c0_1 = arith.constant 0 : index
    %c0_2 = arith.constant 0 : index
    %2 = vector.load %arg1[%c0_1, %c0_2] : memref<177x128xf32, #tpu.memory_space<vmem>>, vector<1x128xf32>
    %3 = arith.mulf %2, %1 : vector<1x128xf32>
    %c1 = arith.constant 1 : index
    %c0_3 = arith.constant 0 : index
    %4 = vector.load %arg1[%c1, %c0_3] : memref<177x128xf32, #tpu.memory_space<vmem>>, vector<1x128xf32>
    %5 = arith.addf %3, %4 : vector<1x128xf32>
    %cst = arith.constant 0.000000e+00 : f32
    %6 = vector.broadcast %cst : f32 to vector<1x128xf32>
    %7 = arith.maximumf %5, %6 : vector<1x128xf32>
    %c8 = arith.constant 8 : index
    %c0_4 = arith.constant 0 : index
    %8 = vector.load %arg1[%c8, %c0_4] : memref<177x128xf32, #tpu.memory_space<vmem>>, vector<128x32xf32>
    %cst_5 = arith.constant dense<0.000000e+00> : vector<1x32xf32>
    %9 = tpu.matmul %7, %8, %cst_5 {dimension_numbers = #tpu.dot_dimension_numbers<[1], [0], [0], [1], [0, 0, 1, 1], [], []>} : vector<1x128xf32>, vector<128x32xf32>, vector<1x32xf32> -> vector<1x32xf32>
    %c136 = arith.constant 136 : index
    %c0_6 = arith.constant 0 : index
    %10 = vector.load %arg1[%c136, %c0_6] : memref<177x128xf32, #tpu.memory_space<vmem>>, vector<1x32xf32>
    %11 = arith.addf %9, %10 : vector<1x32xf32>
    %cst_7 = arith.constant 0.000000e+00 : f32
    %12 = vector.broadcast %cst_7 : f32 to vector<1x32xf32>
    %13 = arith.maximumf %11, %12 : vector<1x32xf32>
    %c144 = arith.constant 144 : index
    %c0_8 = arith.constant 0 : index
    %14 = vector.load %arg1[%c144, %c0_8] : memref<177x128xf32, #tpu.memory_space<vmem>>, vector<32x1xf32>
    %cst_9 = arith.constant dense<0.000000e+00> : vector<1x1xf32>
    %15 = tpu.matmul %13, %14, %cst_9 {dimension_numbers = #tpu.dot_dimension_numbers<[1], [0], [0], [1], [0, 0, 1, 1], [], []>} : vector<1x32xf32>, vector<32x1xf32>, vector<1x1xf32> -> vector<1x1xf32>
    %c176 = arith.constant 176 : index
    %c0_10 = arith.constant 0 : index
    %16 = vector.load %arg1[%c176, %c0_10] : memref<177x128xf32, #tpu.memory_space<vmem>>, vector<1x1xf32>
    %17 = arith.addf %15, %16 : vector<1x1xf32>
    %c0_11 = arith.constant 0 : index
    %c0_12 = arith.constant 0 : index
    %18 = vector.load %arg2[%c0_11, %c0_12] : memref<1x1xf32, #tpu.memory_space<vmem>>, vector<1x1xf32>
    tpu.vector_store %arg2[%c0_11, %c0_12], %17 {strides = array<i32>} : memref<1x1xf32, #tpu.memory_space<vmem>>, vector<1x1xf32>,
    return
  }
}

</mosaic_0001>

<llo_original>
// kernel: cntk_1d_forward.1
$region0: #{cntk_1d_forward.1}
  #allocation0 [shape = 'u32[]', space=smem, size = 0x4, offset = 0x4, fixed_abs, tag = 'smem constant byte address 0x4 - core index']
  #allocation1 [shape = 'u32[144,128]{1,0:T(1,128)}', space=vmem, size = 0x12000, scoped, tag = 'internal scratch']
  %s0 = inlined_call_operand.vmem [shape: f32[1,16], index: 0, kind: input, shape index: {}]
  %s1 = inlined_call_operand.hbm [shape: f32[177,128], index: 1, kind: input, shape index: {}]
  %s2 = inlined_call_operand.hbm [shape: f32[1,1], index: 2, kind: output, shape index: {}]
  %s3 = sld [smem:[#allocation0]]
  $region22: #{cntk_1d_forward.1} parent=0
    _
  %s5 = ssub.s32 1, %s3
  %s6 = scalar_select 0, %s5, %s3
  $region1: #{cntk_1d_forward.1} parent=0
    #allocation2 [shape = 'u8[94208]{0}', space=vmem, size = 0x17000, scoped, tag = 'input window, operand 1, single buffered']
    #allocation3 [shape = 's32[1]{0}', space=sflag, size = 0x4, scoped, tag = 'scoped memory for cntk_1d_forward.1']
    #allocation4 [shape = 's32[1]{0}', space=sflag, size = 0x4, scoped, tag = 'scoped memory for cntk_1d_forward.1']
    #allocation5 [shape = 'u8[512]{0}', space=vmem, size = 0x400, scoped, tag = 'output window, operand 0, single buffered']
    %7 = vsyncpa [#allocation3], 0
    %8 = vsyncpa [#allocation4], 0
    // Predicated region
    $region2: #{cntk_1d_forward.1} parent=1 // pred_check
      _
    $region3: #{cntk_1d_forward.1} parent=1 // pred_check_branch
      %10 = sbr.rel (0) target = $region5
    $region4: #{cntk_1d_forward.1} parent=1 // pred_region
      _
    $region5: #{cntk_1d_forward.1} parent=1 // pred_fallthru
      _
    // Predicated region
    $region6: #{cntk_1d_forward.1} parent=1 // pred_check
      _
    $region7: #{cntk_1d_forward.1} parent=1 // pred_check_branch
      %12 = sbr.rel (0) target = $region9
    $region8: #{cntk_1d_forward.1} parent=1 // pred_region
      %s14 = ssub.s32 2944, 2944
      %15 = vsyncadd [#allocation3], %s14
      %s16 = sshll.u32 [#allocation2], 4
      %s17 = int_to_ptr.vmem [resolvable:$true] %s16
      %22 = dma.hbm_to_vmem [thread:$0]  %s1, 2944, %s17, [#allocation3], 128, 128, 8
    $region9: #{cntk_1d_forward.1} parent=1 // pred_fallthru
      _
    // Predicated region
    $region10: #{cntk_1d_forward.1} parent=1 // pred_check
      _
    $region11: #{cntk_1d_forward.1} parent=1 // pred_check_branch
      %24 = sbr.rel (0) target = $region13
    $region12: #{cntk_1d_forward.1} parent=1 // pred_region
      %25 = dma.done [#allocation3], 2944
    $region13: #{cntk_1d_forward.1} parent=1 // pred_fallthru
      _
    %v26 = vld [vmem:[%s0] sm:$0x1]
    %v28 = vlaneseq
    %v29 = vshrl.u32 %v28, 7
    %v30 = vsub.s32 0, %v29
    %v31 = vrot.slane %v26, %v30
    %32 = vrot.lane.b32.xlu0 %v31, 16
    %v33 = vpop.permute.xlu0 %32
    %35 = vrot.lane.b32.xlu0 %v31, 32
    %v36 = vpop.permute.xlu0 %35
    %38 = vrot.lane.b32.xlu0 %v31, 48
    %v39 = vpop.permute.xlu0 %38
    %41 = vrot.lane.b32.xlu0 %v31, 64
    %v42 = vpop.permute.xlu0 %41
    %44 = vrot.lane.b32.xlu0 %v31, 80
    %v45 = vpop.permute.xlu0 %44
    %47 = vrot.lane.b32.xlu0 %v31, 96
    %v48 = vpop.permute.xlu0 %47
    %50 = vrot.lane.b32.xlu0 %v31, 112
    %v51 = vpop.permute.xlu0 %50
    %vm53 = vcmask 130048
    %v54 = vsel %vm53, %v26, %v33
    %vm55 = vcmask 261120
    %v56 = vsel %vm55, %v54, %v36
    %vm57 = vcmask 392192
    %v58 = vsel %vm57, %v56, %v39
    %vm59 = vcmask 523264
    %v60 = vsel %vm59, %v58, %v42
    %vm61 = vcmask 654336
    %v62 = vsel %vm61, %v60, %v45
    %vm63 = vcmask 785408
    %v64 = vsel %vm63, %v62, %v48
    %vm65 = vcmask 916480
    %v66 = vsel %vm65, %v64, %v51
    %v67 = vld [vmem:[#allocation2] sm:$0x1]
    %v68 = vmul.f32 %v67, %v66
    %v69 = vld [vmem:[#allocation2 + $0x1] sm:$0x1]
    %v70 = vadd.f32 %v68, %v69
    %v71 = vmax.f32 %v70, 0.0
    %v72 = vld [vmem:[#allocation2 + $0x8] sm:$0xff]
    %v73 = vld [vmem:[#allocation2 + $0x10] sm:$0xff]
    %v74 = vld [vmem:[#allocation2 + $0x18] sm:$0xff]
    %v75 = vld [vmem:[#allocation2 + $0x20] sm:$0xff]
    %v76 = vld [vmem:[#allocation2 + $0x28] sm:$0xff]
    %v77 = vld [vmem:[#allocation2 + $0x30] sm:$0xff]
    %v78 = vld [vmem:[#allocation2 + $0x38] sm:$0xff]
    %v79 = vld [vmem:[#allocation2 + $0x40] sm:$0xff]
    %v80 = vld [vmem:[#allocation2 + $0x48] sm:$0xff]
    %v81 = vld [vmem:[#allocation2 + $0x50] sm:$0xff]
    %v82 = vld [vmem:[#allocation2 + $0x58] sm:$0xff]
    %v83 = vld [vmem:[#allocation2 + $0x60] sm:$0xff]
    %v84 = vld [vmem:[#allocation2 + $0x68] sm:$0xff]
    %v85 = vld [vmem:[#allocation2 + $0x70] sm:$0xff]
    %v86 = vld [vmem:[#allocation2 + $0x78] sm:$0xff]
    %v87 = vld [vmem:[#allocation2 + $0x80] sm:$0xff]
    %v88 = vld [vmem:[#allocation2 + $0x88] sm:$0x1]
    %89 = vmatprep.subr.mxu0 0.0
    %90 = vmatpush1.msra.mxu0 %v87
    %91 = vmatprep.subr.mxu0 0.0
    %92 = vmatpush1.msra.mxu0 %v86
    %93 = vmatprep.subr.mxu0 0.0
    %94 = vmatpush1.msra.mxu0 %v85
    %95 = vmatprep.subr.mxu0 0.0
    %96 = vmatpush1.msra.mxu0 %v84
    %97 = vmatprep.subr.mxu0 0.0
    %98 = vmatpush1.msra.mxu0 %v83
    %99 = vmatprep.subr.mxu0 0.0
    %100 = vmatpush1.msra.mxu0 %v82
    %101 = vmatprep.subr.mxu0 0.0
    %102 = vmatpush1.msra.mxu0 %v81
    %103 = vmatprep.subr.mxu0 0.0
    %104 = vmatpush1.msra.mxu0 %v80
    %105 = vmatprep.subr.mxu0 0.0
    %106 = vmatpush1.msra.mxu0 %v79
    %107 = vmatprep.subr.mxu0 0.0
    %108 = vmatpush1.msra.mxu0 %v78
    %109 = vmatprep.subr.mxu0 0.0
    %110 = vmatpush1.msra.mxu0 %v77
    %111 = vmatprep.subr.mxu0 0.0
    %112 = vmatpush1.msra.mxu0 %v76
    %113 = vmatprep.subr.mxu0 0.0
    %114 = vmatpush1.msra.mxu0 %v75
    %115 = vmatprep.subr.mxu0 0.0
    %116 = vmatpush1.msra.mxu0 %v74
    %117 = vmatprep.subr.mxu0 0.0
    %118 = vmatpush1.msra.mxu0 %v73
    %119 = vmatprep.subr.mxu0 0.0
    %120 = vmatpush1.msra.mxu0 %v72
    %121 = vmatprep.subr.mxu0 0.0
    %122 = vmatpush2.msra.mxu0 0.0
    %123 = vmatprep.subr.mxu0 0.0
    %124 = vmatpush2.msra.mxu0 0.0
    %125 = vmatprep.subr.mxu0 0.0
    %126 = vmatpush2.msra.mxu0 0.0
    %127 = vmatprep.subr.mxu0 0.0
    %128 = vmatpush2.msra.mxu0 0.0
    %129 = vmatprep.subr.mxu0 0.0
    %130 = vmatpush2.msra.mxu0 0.0
    %131 = vmatprep.subr.mxu0 0.0
    %132 = vmatpush2.msra.mxu0 0.0
    %133 = vmatprep.subr.mxu0 0.0
    %134 = vmatpush2.msra.mxu0 0.0
    %135 = vmatprep.subr.mxu0 0.0
    %136 = vmatpush2.msra.mxu0 0.0
    %137 = vmatprep.subr.mxu0 0.0
    %138 = vmatpush2.msra.mxu0 0.0
    %139 = vmatprep.subr.mxu0 0.0
    %140 = vmatpush2.msra.mxu0 0.0
    %141 = vmatprep.subr.mxu0 0.0
    %142 = vmatpush2.msra.mxu0 0.0
    %143 = vmatprep.subr.mxu0 0.0
    %144 = vmatpush2.msra.mxu0 0.0
    %145 = vmatprep.subr.mxu0 0.0
    %146 = vmatpush2.msra.mxu0 0.0
    %147 = vmatprep.subr.mxu0 0.0
    %148 = vmatpush2.msra.mxu0 0.0
    %149 = vmatprep.subr.mxu0 0.0
    %150 = vmatpush2.msra.mxu0 0.0
    %151 = vmatprep.subr.mxu0 0.0
    %152 = vmatpush2.msra.mxu0 0.0
    %153 = vmatprep.mubr.f32.mxu0 0.0
    %154 = vmatmul.mubr.f32.gmra.mxu0 %v71
    %v155 = vpop.f32.mrf.mxu0
    %v156 = vadd.f32 %v88, %v155
    %v157 = vpop.f32.mrf.mxu0
    %158 = vdwg.mxu0
    %v159 = vmax.f32 %v156, 0.0
    %v160 = vld [vmem:[#allocation2 + $0x90] sm:$0xff]
    %v161 = vld [vmem:[#allocation2 + $0x98] sm:$0xff]
    %v162 = vld [vmem:[#allocation2 + $0xa0] sm:$0xff]
    %v163 = vld [vmem:[#allocation2 + $0xa8] sm:$0xff]
    %v164 = vld [vmem:[#allocation2 + $0xb0] sm:$0x1]
    %v166 = vsel %vm55, %v159, 0
    %168 = vmatprep.subr.mxu0 0.0
    %169 = vmatpush1.msra.mxu0 0.0
    %170 = vmatprep.subr.mxu0 0.0
    %171 = vmatpush1.msra.mxu0 0.0
    %172 = vmatprep.subr.mxu0 0.0
    %173 = vmatpush1.msra.mxu0 0.0
    %174 = vmatprep.subr.mxu0 0.0
    %175 = vmatpush1.msra.mxu0 0.0
    %176 = vmatprep.subr.mxu0 0.0
    %177 = vmatpush1.msra.mxu0 0.0
    %178 = vmatprep.subr.mxu0 0.0
    %179 = vmatpush1.msra.mxu0 0.0
    %180 = vmatprep.subr.mxu0 0.0
    %181 = vmatpush1.msra.mxu0 0.0
    %182 = vmatprep.subr.mxu0 0.0
    %183 = vmatpush1.msra.mxu0 0.0
    %184 = vmatprep.subr.mxu0 0.0
    %185 = vmatpush1.msra.mxu0 0.0
    %186 = vmatprep.subr.mxu0 0.0
    %187 = vmatpush1.msra.mxu0 0.0
    %188 = vmatprep.subr.mxu0 0.0
    %189 = vmatpush1.msra.mxu0 0.0
    %190 = vmatprep.subr.mxu0 0.0
    %191 = vmatpush1.msra.mxu0 0.0
    %192 = vmatprep.subr.mxu0 0.0
    %193 = vmatpush1.msra.mxu0 %v163
    %194 = vmatprep.subr.mxu0 0.0
    %195 = vmatpush1.msra.mxu0 %v162
    %196 = vmatprep.subr.mxu0 0.0
    %197 = vmatpush1.msra.mxu0 %v161
    %198 = vmatprep.subr.mxu0 0.0
    %199 = vmatpush1.msra.mxu0 %v160
    %200 = vmatprep.subr.mxu0 0.0
    %201 = vmatpush2.msra.mxu0 0.0
    %202 = vmatprep.subr.mxu0 0.0
    %203 = vmatpush2.msra.mxu0 0.0
    %204 = vmatprep.subr.mxu0 0.0
    %205 = vmatpush2.msra.mxu0 0.0
    %206 = vmatprep.subr.mxu0 0.0
    %207 = vmatpush2.msra.mxu0 0.0
    %208 = vmatprep.subr.mxu0 0.0
    %209 = vmatpush2.msra.mxu0 0.0
    %210 = vmatprep.subr.mxu0 0.0
    %211 = vmatpush2.msra.mxu0 0.0
    %212 = vmatprep.subr.mxu0 0.0
    %213 = vmatpush2.msra.mxu0 0.0
    %214 = vmatprep.subr.mxu0 0.0
    %215 = vmatpush2.msra.mxu0 0.0
    %216 = vmatprep.subr.mxu0 0.0
    %217 = vmatpush2.msra.mxu0 0.0
    %218 = vmatprep.subr.mxu0 0.0
    %219 = vmatpush2.msra.mxu0 0.0
    %220 = vmatprep.subr.mxu0 0.0
    %221 = vmatpush2.msra.mxu0 0.0
    %222 = vmatprep.subr.mxu0 0.0
    %223 = vmatpush2.msra.mxu0 0.0
    %224 = vmatprep.subr.mxu0 0.0
    %225 = vmatpush2.msra.mxu0 0.0
    %226 = vmatprep.subr.mxu0 0.0
    %227 = vmatpush2.msra.mxu0 0.0
    %228 = vmatprep.subr.mxu0 0.0
    %229 = vmatpush2.msra.mxu0 0.0
    %230 = vmatprep.subr.mxu0 0.0
    %231 = vmatpush2.msra.mxu0 0.0
    %232 = vmatprep.mubr.f32.mxu0 0.0
    %233 = vmatmul.mubr.f32.gmra.mxu0 %v166
    %v234 = vpop.f32.mrf.mxu0
    %v235 = vadd.f32 %v164, %v234
    %v236 = vpop.f32.mrf.mxu0
    %237 = vdwg.mxu0
    %vm238 = vcmask 0
    %239 = vst.msk [vmem:[#allocation5] sm:$0x1] %vm238, %v235
    // Predicated region
    $region14: #{cntk_1d_forward.1} parent=1 // pred_check
      _
    $region15: #{cntk_1d_forward.1} parent=1 // pred_check_branch
      %241 = sbr.rel (0) target = $region17
    $region16: #{cntk_1d_forward.1} parent=1 // pred_region
      %s243 = ssub.s32 16, 16
      %244 = vsyncadd [#allocation4], %s243
      %s246 = sshll.u32 [#allocation5], 4
      %s247 = int_to_ptr.vmem [resolvable:$true] %s246
      %249 = dma.vmem_to_hbm [thread:$0]  %s247, 16, %s2, [#allocation4]
    $region17: #{cntk_1d_forward.1} parent=1 // pred_fallthru
      _
    // Predicated region
    $region18: #{cntk_1d_forward.1} parent=1 // pred_check
      _
    $region19: #{cntk_1d_forward.1} parent=1 // pred_check_branch
      %251 = sbr.rel (0) target = $region21
    $region20: #{cntk_1d_forward.1} parent=1 // pred_region
      %252 = dma.done [#allocation4], 16
    $region21: #{cntk_1d_forward.1} parent=1 // pred_fallthru
      _
    %253 = vsyncpa [#allocation3], 1
    %254 = vsyncpa [#allocation4], 1

</llo_original>
